<compile_context>
chip_gen: v6e
topology: v6e:2x2x1
jax: 0.10.0
libtpu: 0.0.40
codegen_flags: <defaults>
</compile_context>

<pallas_src>
import jax
import jax.numpy as jnp
from jax.experimental import pallas as pl
from jax.experimental.pallas import tpu as pltpu


def _make_kernel(C, nr, nv, Nv, r0, v0, K_pad):
    """Build the kernel closure with all static geometry (incl. bbox) baked in."""
    HW = nr * nv
    KC = 9 * C
    FRAME = nv + 1  # zero frame wide enough for the largest tap shift (nv + 1)

    def kernel(w_ref, x_ref, bias_ref, out_ref, xnf_ref, p_ref):
        # w_ref    : (O, K_pad)         flattened 3x3 weights + bias column (+zero pad)  VMEM
        # x_ref    : (C, nr*nv)         spatially-flat cropped input                     VMEM
        # bias_ref : (C, Nr*Nv)         spatially-flat full moving bias                  VMEM
        # out_ref  : (O, nr*nv)         lane-dense output                                VMEM
        # xnf_ref  : (C, HW + 2*FRAME)  scratch: zero-framed flat (x - cropped bias)     VMEM
        # p_ref    : (K_pad, HW)        scratch: im2col patch matrix (+ ones/pad rows)   VMEM

        # ---- 1) fused crop + semi-normalization into a zero-framed flat buffer ----
        x_full = x_ref[...].astype(jnp.float32)        # (C, HW)
        bias_full = bias_ref[...].astype(jnp.float32)  # (C, Nr*Nv)
        xnf_ref[...] = jnp.zeros_like(xnf_ref)         # zeroes both frames in one store
        for i in range(nr):                            # unrolled: nr static row copies
            src = (r0 + i) * Nv + v0                   # flat offset of cropped bias row i
            xnf_ref[:, FRAME + i * nv: FRAME + (i + 1) * nv] = (
                x_full[:, i * nv:(i + 1) * nv] - bias_full[:, src:src + nv])
        xnf = xnf_ref[...]                             # (C, HW + 2*FRAME)

        # ---- 2) im2col: 9 statically shifted windows of the framed flat signal ----
        # In-row column index j, used only for the left/right edge masks (hoisted).
        col = jax.lax.broadcasted_iota(jnp.int32, (C, HW), 1)
        if nv & (nv - 1) == 0:
            jj = jnp.bitwise_and(col, nv - 1)
        else:
            jj = col - (col // nv) * nv  # TODO(synk): non-power-of-two nv path untested

        # Tail rows written once: row KC is all-ones (folds conv bias into the matmul),
        # rows KC+1..K_pad-1 are the zero padding up to a sublane multiple.
        tail_row = jax.lax.broadcasted_iota(jnp.int32, (K_pad - KC, HW), 0)
        p_ref[KC:K_pad, :] = jnp.where(tail_row == 0, 1.0, 0.0).astype(jnp.float32)

        for kh in range(3):
            for kw in range(3):
                dh, dw = kh - 1, kw - 1
                shift = dh * nv + dw
                window = xnf[:, FRAME + shift: FRAME + shift + HW]   # (C, HW)
                # Rows falling outside [0, nr) land in the zero frame automatically;
                # only row-wrap along the flattened lane axis needs masking.
                if dw == -1:
                    window = jnp.where(jj >= 1, window, 0.0)
                elif dw == 1:
                    window = jnp.where(jj < nv - 1, window, 0.0)
                k = kh * 3 + kw
                p_ref[k * C:(k + 1) * C, :] = window

        # ---- 3) whole conv (+ bias) as one MXU matmul, then LeakyReLU ----
        acc = jnp.dot(w_ref[...], p_ref[...], preferred_element_type=jnp.float32)
        # TODO(synk): nn.Dropout is identity at inference; training-mode dropout
        # (random mask + 1/(1-p) scaling) is not implemented here.
        acc = jnp.where(acc >= 0, acc, 0.01 * acc)     # LeakyReLU(negative_slope=0.01)
        out_ref[...] = acc.astype(out_ref.dtype)

    return kernel


def moving_bias_conv(x, moving_bias, conv_w, conv_b, bbox=None):
    """x: (C, nr, nv); moving_bias: (C, Nr, Nv); conv_w: (O, C, 3, 3); conv_b: (O,)."""
    C, nr, nv = x.shape
    O = conv_w.shape[0]
    Cb, Nr, Nv = moving_bias.shape
    if conv_w.shape != (O, C, 3, 3):
        raise ValueError(f"bad conv weight shape {conv_w.shape}")
    if Cb != C:
        raise ValueError(
            f"input of shape {x.shape} does not match bias of shape {moving_bias.shape}")
    if bbox is None:
        if (Nr, Nv) != (nr, nv):
            raise ValueError(
                f"input of shape {x.shape} does not match bias of shape {moving_bias.shape}")
        r0, v0 = 0, 0
    else:
        r0, v0, r1, v1 = bbox  # static Python ints (same contract as the PyTorch module)
        if (r1 - r0, v1 - v0) != (nr, nv):
            raise ValueError(
                f"input of shape {x.shape} does not match bbox of shape {[r1 - r0, v1 - v0]}")

    HW = nr * nv
    KC = 9 * C
    K_pad = ((KC + 1 + 7) // 8) * 8  # 9*C taps + 1 bias row, rounded to a sublane multiple

    # Parameter prep (in a real model this is precomputed once, not per call):
    #   W2[o, (kh*3+kw)*C + c] = conv_w[o, c, kh, kw];  W2[o, 9*C] = conv_b[o];  rest 0.
    w_t = jnp.transpose(conv_w, (0, 2, 3, 1)).reshape(O, KC).astype(jnp.float32)
    w2 = jnp.concatenate(
        [w_t, conv_b.astype(jnp.float32)[:, None],
         jnp.zeros((O, K_pad - KC - 1), jnp.float32)], axis=1)

    # Contiguous (bitcast-level) flattens only — crop + conv zero-padding are in-kernel.
    x_flat = x.reshape(C, HW)
    bias_flat = moving_bias.reshape(C, Nr * Nv)

    kernel = _make_kernel(C, nr, nv, Nv, r0, v0, K_pad)
    out_flat = pl.pallas_call(
        kernel,
        out_shape=jax.ShapeDtypeStruct((O, HW), x.dtype),
        in_specs=[
            pl.BlockSpec(memory_space=pltpu.MemorySpace.VMEM),   # w2
            pl.BlockSpec(memory_space=pltpu.MemorySpace.VMEM),   # x_flat
            pl.BlockSpec(memory_space=pltpu.MemorySpace.VMEM),   # bias_flat
        ],
        out_specs=pl.BlockSpec(memory_space=pltpu.MemorySpace.VMEM),
        scratch_shapes=[
            pltpu.VMEM((C, HW + 2 * (nv + 1)), jnp.float32),     # framed flat xn
            pltpu.VMEM((K_pad, HW), jnp.float32),                # im2col patch matrix
        ],
        # No grid -> no pipelining/double-buffering; explicit limit is just headroom
        # bookkeeping for scaled-up tracker sizes (v7x has only 64 MiB VMEM).
        compiler_params=pltpu.CompilerParams(vmem_limit_bytes=32 * 1024 * 1024),
    )(w2, x_flat, bias_flat)
    return out_flat.reshape(O, nr, nv)


if __name__ == "__main__":
    key = jax.random.PRNGKey(0)
    kb, kw, kc, kx = jax.random.split(key, 4)

    # in_channels=4, out_channels=8, full image (Nr, Nv)=(24, 24), crop 16x16
    C, O = 4, 8
    Nr, Nv = 24, 24
    nr, nv = 16, 16
    bbox = (4, 4, 4 + nr, 4 + nv)

    moving_bias = jax.random.normal(kb, (C, Nr, Nv), dtype=jnp.float32)  # nn.Parameter(randn)
    conv_w = 0.1 * jax.random.normal(kw, (O, C, 3, 3), dtype=jnp.float32)
    conv_b = 0.1 * jax.random.normal(kc, (O,), dtype=jnp.float32)
    x = jax.random.normal(kx, (C, nr, nv), dtype=jnp.float32)

    fwd = jax.jit(moving_bias_conv, static_argnames=("bbox",))
    y = jax.block_until_ready(fwd(x, moving_bias, conv_w, conv_b, bbox=bbox))
    assert y.shape == (O, nr, nv) and y.dtype == jnp.float32

    # Pure-JAX reference (eval-mode dropout = identity)
    bias_c = moving_bias[:, bbox[0]:bbox[2], bbox[1]:bbox[3]]
    xn = (x - bias_c)[None]
    ref = jax.lax.conv_general_dilated(
        xn, conv_w, window_strides=(1, 1), padding="SAME",
        dimension_numbers=("NCHW", "OIHW", "NCHW"),
        precision=jax.lax.Precision.HIGHEST)[0] + conv_b[:, None, None]
    ref = jnp.where(ref >= 0, ref, 0.01 * ref)
    # Tolerance allows for reduced-precision MXU passes on the f32 matmul while still
    # catching structural bugs (wrong crop offset / tap layout would be O(0.1) errors).
    err = float(jnp.max(jnp.abs(y - ref)))
    assert jnp.allclose(y, ref, atol=2e-2, rtol=2e-2), err

    print("KERNEL_OK")
</pallas_src>

<mosaic_0001>
module attributes {stable_mosaic.version = 11 : i64} {
  func.func @kernel(%arg0: memref<8x40xf32, #tpu.memory_space<vmem>>, %arg1: memref<4x256xf32, #tpu.memory_space<vmem>>, %arg2: memref<4x576xf32, #tpu.memory_space<vmem>>, %arg3: memref<8x256xf32, #tpu.memory_space<vmem>>, %arg4: memref<4x290xf32, #tpu.memory_space<vmem>>, %arg5: memref<40x256xf32, #tpu.memory_space<vmem>>) attributes {dimension_semantics = [], scalar_prefetch = 0 : i64, scratch_operands = 2 : i64, tpu.core_type = #tpu.core_type<tc>} {
    %c0 = arith.constant 0 : index
    %c0_0 = arith.constant 0 : index
    %0 = vector.load %arg1[%c0, %c0_0] : memref<4x256xf32, #tpu.memory_space<vmem>>, vector<4x256xf32>
    %c0_1 = arith.constant 0 : index
    %c0_2 = arith.constant 0 : index
    %1 = vector.load %arg2[%c0_1, %c0_2] : memref<4x576xf32, #tpu.memory_space<vmem>>, vector<4x576xf32>
    %cst = arith.constant 0.000000e+00 : f32
    %2 = vector.broadcast %cst : f32 to vector<4x290xf32>
    %c0_3 = arith.constant 0 : index
    %c0_4 = arith.constant 0 : index
    %3 = vector.load %arg4[%c0_3, %c0_4] : memref<4x290xf32, #tpu.memory_space<vmem>>, vector<4x290xf32>
    tpu.vector_store %arg4[%c0_3, %c0_4], %2 {strides = array<i32>} : memref<4x290xf32, #tpu.memory_space<vmem>>, vector<4x290xf32>,
    %4 = vector.extract_strided_slice %0 {offsets = [0, 0], sizes = [4, 16], strides = [1, 1]} : vector<4x256xf32> to vector<4x16xf32>
    %5 = vector.extract_strided_slice %1 {offsets = [0, 100], sizes = [4, 16], strides = [1, 1]} : vector<4x576xf32> to vector<4x16xf32>
    %6 = arith.subf %4, %5 : vector<4x16xf32>
    %c0_5 = arith.constant 0 : index
    %c17 = arith.constant 17 : index
    %7 = vector.load %arg4[%c0_5, %c17] : memref<4x290xf32, #tpu.memory_space<vmem>>, vector<4x16xf32>
    tpu.vector_store %arg4[%c0_5, %c17], %6 {strides = array<i32>} : memref<4x290xf32, #tpu.memory_space<vmem>>, vector<4x16xf32>,
    %8 = vector.extract_strided_slice %0 {offsets = [0, 16], sizes = [4, 16], strides = [1, 1]} : vector<4x256xf32> to vector<4x16xf32>
    %9 = vector.extract_strided_slice %1 {offsets = [0, 124], sizes = [4, 16], strides = [1, 1]} : vector<4x576xf32> to vector<4x16xf32>
    %10 = arith.subf %8, %9 : vector<4x16xf32>
    %c0_6 = arith.constant 0 : index
    %c33 = arith.constant 33 : index
    %11 = vector.load %arg4[%c0_6, %c33] : memref<4x290xf32, #tpu.memory_space<vmem>>, vector<4x16xf32>
    tpu.vector_store %arg4[%c0_6, %c33], %10 {strides = array<i32>} : memref<4x290xf32, #tpu.memory_space<vmem>>, vector<4x16xf32>,
    %12 = vector.extract_strided_slice %0 {offsets = [0, 32], sizes = [4, 16], strides = [1, 1]} : vector<4x256xf32> to vector<4x16xf32>
    %13 = vector.extract_strided_slice %1 {offsets = [0, 148], sizes = [4, 16], strides = [1, 1]} : vector<4x576xf32> to vector<4x16xf32>
    %14 = arith.subf %12, %13 : vector<4x16xf32>
    %c0_7 = arith.constant 0 : index
    %c49 = arith.constant 49 : index
    %15 = vector.load %arg4[%c0_7, %c49] : memref<4x290xf32, #tpu.memory_space<vmem>>, vector<4x16xf32>
    tpu.vector_store %arg4[%c0_7, %c49], %14 {strides = array<i32>} : memref<4x290xf32, #tpu.memory_space<vmem>>, vector<4x16xf32>,
    %16 = vector.extract_strided_slice %0 {offsets = [0, 48], sizes = [4, 16], strides = [1, 1]} : vector<4x256xf32> to vector<4x16xf32>
    %17 = vector.extract_strided_slice %1 {offsets = [0, 172], sizes = [4, 16], strides = [1, 1]} : vector<4x576xf32> to vector<4x16xf32>
    %18 = arith.subf %16, %17 : vector<4x16xf32>
    %c0_8 = arith.constant 0 : index
    %c65 = arith.constant 65 : index
    %19 = vector.load %arg4[%c0_8, %c65] : memref<4x290xf32, #tpu.memory_space<vmem>>, vector<4x16xf32>
    tpu.vector_store %arg4[%c0_8, %c65], %18 {strides = array<i32>} : memref<4x290xf32, #tpu.memory_space<vmem>>, vector<4x16xf32>,
    %20 = vector.extract_strided_slice %0 {offsets = [0, 64], sizes = [4, 16], strides = [1, 1]} : vector<4x256xf32> to vector<4x16xf32>
    %21 = vector.extract_strided_slice %1 {offsets = [0, 196], sizes = [4, 16], strides = [1, 1]} : vector<4x576xf32> to vector<4x16xf32>
    %22 = arith.subf %20, %21 : vector<4x16xf32>
    %c0_9 = arith.constant 0 : index
    %c81 = arith.constant 81 : index
    %23 = vector.load %arg4[%c0_9, %c81] : memref<4x290xf32, #tpu.memory_space<vmem>>, vector<4x16xf32>
    tpu.vector_store %arg4[%c0_9, %c81], %22 {strides = array<i32>} : memref<4x290xf32, #tpu.memory_space<vmem>>, vector<4x16xf32>,
    %24 = vector.extract_strided_slice %0 {offsets = [0, 80], sizes = [4, 16], strides = [1, 1]} : vector<4x256xf32> to vector<4x16xf32>
    %25 = vector.extract_strided_slice %1 {offsets = [0, 220], sizes = [4, 16], strides = [1, 1]} : vector<4x576xf32> to vector<4x16xf32>
    %26 = arith.subf %24, %25 : vector<4x16xf32>
    %c0_10 = arith.constant 0 : index
    %c97 = arith.constant 97 : index
    %27 = vector.load %arg4[%c0_10, %c97] : memref<4x290xf32, #tpu.memory_space<vmem>>, vector<4x16xf32>
    tpu.vector_store %arg4[%c0_10, %c97], %26 {strides = array<i32>} : memref<4x290xf32, #tpu.memory_space<vmem>>, vector<4x16xf32>,
    %28 = vector.extract_strided_slice %0 {offsets = [0, 96], sizes = [4, 16], strides = [1, 1]} : vector<4x256xf32> to vector<4x16xf32>
    %29 = vector.extract_strided_slice %1 {offsets = [0, 244], sizes = [4, 16], strides = [1, 1]} : vector<4x576xf32> to vector<4x16xf32>
    %30 = arith.subf %28, %29 : vector<4x16xf32>
    %c0_11 = arith.constant 0 : index
    %c113 = arith.constant 113 : index
    %31 = vector.load %arg4[%c0_11, %c113] : memref<4x290xf32, #tpu.memory_space<vmem>>, vector<4x16xf32>
    tpu.vector_store %arg4[%c0_11, %c113], %30 {strides = array<i32>} : memref<4x290xf32, #tpu.memory_space<vmem>>, vector<4x16xf32>,
    %32 = vector.extract_strided_slice %0 {offsets = [0, 112], sizes = [4, 16], strides = [1, 1]} : vector<4x256xf32> to vector<4x16xf32>
    %33 = vector.extract_strided_slice %1 {offsets = [0, 268], sizes = [4, 16], strides = [1, 1]} : vector<4x576xf32> to vector<4x16xf32>
    %34 = arith.subf %32, %33 : vector<4x16xf32>
    %c0_12 = arith.constant 0 : index
    %c129 = arith.constant 129 : index
    %35 = vector.load %arg4[%c0_12, %c129] : memref<4x290xf32, #tpu.memory_space<vmem>>, vector<4x16xf32>
    tpu.vector_store %arg4[%c0_12, %c129], %34 {strides = array<i32>} : memref<4x290xf32, #tpu.memory_space<vmem>>, vector<4x16xf32>,
    %36 = vector.extract_strided_slice %0 {offsets = [0, 128], sizes = [4, 16], strides = [1, 1]} : vector<4x256xf32> to vector<4x16xf32>
    %37 = vector.extract_strided_slice %1 {offsets = [0, 292], sizes = [4, 16], strides = [1, 1]} : vector<4x576xf32> to vector<4x16xf32>
    %38 = arith.subf %36, %37 : vector<4x16xf32>
    %c0_13 = arith.constant 0 : index
    %c145 = arith.constant 145 : index
    %39 = vector.load %arg4[%c0_13, %c145] : memref<4x290xf32, #tpu.memory_space<vmem>>, vector<4x16xf32>
    tpu.vector_store %arg4[%c0_13, %c145], %38 {strides = array<i32>} : memref<4x290xf32, #tpu.memory_space<vmem>>, vector<4x16xf32>,
    %40 = vector.extract_strided_slice %0 {offsets = [0, 144], sizes = [4, 16], strides = [1, 1]} : vector<4x256xf32> to vector<4x16xf32>
    %41 = vector.extract_strided_slice %1 {offsets = [0, 316], sizes = [4, 16], strides = [1, 1]} : vector<4x576xf32> to vector<4x16xf32>
    %42 = arith.subf %40, %41 : vector<4x16xf32>
    %c0_14 = arith.constant 0 : index
    %c161 = arith.constant 161 : index
    %43 = vector.load %arg4[%c0_14, %c161] : memref<4x290xf32, #tpu.memory_space<vmem>>, vector<4x16xf32>
    tpu.vector_store %arg4[%c0_14, %c161], %42 {strides = array<i32>} : memref<4x290xf32, #tpu.memory_space<vmem>>, vector<4x16xf32>,
    %44 = vector.extract_strided_slice %0 {offsets = [0, 160], sizes = [4, 16], strides = [1, 1]} : vector<4x256xf32> to vector<4x16xf32>
    %45 = vector.extract_strided_slice %1 {offsets = [0, 340], sizes = [4, 16], strides = [1, 1]} : vector<4x576xf32> to vector<4x16xf32>
    %46 = arith.subf %44, %45 : vector<4x16xf32>
    %c0_15 = arith.constant 0 : index
    %c177 = arith.constant 177 : index
    %47 = vector.load %arg4[%c0_15, %c177] : memref<4x290xf32, #tpu.memory_space<vmem>>, vector<4x16xf32>
    tpu.vector_store %arg4[%c0_15, %c177], %46 {strides = array<i32>} : memref<4x290xf32, #tpu.memory_space<vmem>>, vector<4x16xf32>,
    %48 = vector.extract_strided_slice %0 {offsets = [0, 176], sizes = [4, 16], strides = [1, 1]} : vector<4x256xf32> to vector<4x16xf32>
    %49 = vector.extract_strided_slice %1 {offsets = [0, 364], sizes = [4, 16], strides = [1, 1]} : vector<4x576xf32> to vector<4x16xf32>
    %50 = arith.subf %48, %49 : vector<4x16xf32>
    %c0_16 = arith.constant 0 : index
    %c193 = arith.constant 193 : index
    %51 = vector.load %arg4[%c0_16, %c193] : memref<4x290xf32, #tpu.memory_space<vmem>>, vector<4x16xf32>
    tpu.vector_store %arg4[%c0_16, %c193], %50 {strides = array<i32>} : memref<4x290xf32, #tpu.memory_space<vmem>>, vector<4x16xf32>,
    %52 = vector.extract_strided_slice %0 {offsets = [0, 192], sizes = [4, 16], strides = [1, 1]} : vector<4x256xf32> to vector<4x16xf32>
    %53 = vector.extract_strided_slice %1 {offsets = [0, 388], sizes = [4, 16], strides = [1, 1]} : vector<4x576xf32> to vector<4x16xf32>
    %54 = arith.subf %52, %53 : vector<4x16xf32>
    %c0_17 = arith.constant 0 : index
    %c209 = arith.constant 209 : index
    %55 = vector.load %arg4[%c0_17, %c209] : memref<4x290xf32, #tpu.memory_space<vmem>>, vector<4x16xf32>
    tpu.vector_store %arg4[%c0_17, %c209], %54 {strides = array<i32>} : memref<4x290xf32, #tpu.memory_space<vmem>>, vector<4x16xf32>,
    %56 = vector.extract_strided_slice %0 {offsets = [0, 208], sizes = [4, 16], strides = [1, 1]} : vector<4x256xf32> to vector<4x16xf32>
    %57 = vector.extract_strided_slice %1 {offsets = [0, 412], sizes = [4, 16], strides = [1, 1]} : vector<4x576xf32> to vector<4x16xf32>
    %58 = arith.subf %56, %57 : vector<4x16xf32>
    %c0_18 = arith.constant 0 : index
    %c225 = arith.constant 225 : index
    %59 = vector.load %arg4[%c0_18, %c225] : memref<4x290xf32, #tpu.memory_space<vmem>>, vector<4x16xf32>
    tpu.vector_store %arg4[%c0_18, %c225], %58 {strides = array<i32>} : memref<4x290xf32, #tpu.memory_space<vmem>>, vector<4x16xf32>,
    %60 = vector.extract_strided_slice %0 {offsets = [0, 224], sizes = [4, 16], strides = [1, 1]} : vector<4x256xf32> to vector<4x16xf32>
    %61 = vector.extract_strided_slice %1 {offsets = [0, 436], sizes = [4, 16], strides = [1, 1]} : vector<4x576xf32> to vector<4x16xf32>
    %62 = arith.subf %60, %61 : vector<4x16xf32>
    %c0_19 = arith.constant 0 : index
    %c241 = arith.constant 241 : index
    %63 = vector.load %arg4[%c0_19, %c241] : memref<4x290xf32, #tpu.memory_space<vmem>>, vector<4x16xf32>
    tpu.vector_store %arg4[%c0_19, %c241], %62 {strides = array<i32>} : memref<4x290xf32, #tpu.memory_space<vmem>>, vector<4x16xf32>,
    %64 = vector.extract_strided_slice %0 {offsets = [0, 240], sizes = [4, 16], strides = [1, 1]} : vector<4x256xf32> to vector<4x16xf32>
    %65 = vector.extract_strided_slice %1 {offsets = [0, 460], sizes = [4, 16], strides = [1, 1]} : vector<4x576xf32> to vector<4x16xf32>
    %66 = arith.subf %64, %65 : vector<4x16xf32>
    %c0_20 = arith.constant 0 : index
    %c257 = arith.constant 257 : index
    %67 = vector.load %arg4[%c0_20, %c257] : memref<4x290xf32, #tpu.memory_space<vmem>>, vector<4x16xf32>
    tpu.vector_store %arg4[%c0_20, %c257], %66 {strides = array<i32>} : memref<4x290xf32, #tpu.memory_space<vmem>>, vector<4x16xf32>,
    %c0_21 = arith.constant 0 : index
    %c0_22 = arith.constant 0 : index
    %68 = vector.load %arg4[%c0_21, %c0_22] : memref<4x290xf32, #tpu.memory_space<vmem>>, vector<4x290xf32>
    %69 = tpu.iota {dimensions = array<i32: 1>} : vector<4x256xi32>
    %c15_i32 = arith.constant 15 : i32
    %70 = vector.broadcast %c15_i32 : i32 to vector<4x256xi32>
    %71 = arith.andi %69, %70 : vector<4x256xi32>
    %72 = tpu.iota {dimensions = array<i32: 0>} : vector<4x256xi32>
    %c0_i32 = arith.constant 0 : i32
    %73 = vector.broadcast %c0_i32 : i32 to vector<4x256xi32>
    %74 = arith.cmpi eq, %72, %73 : vector<4x256xi32>
    %cst_23 = arith.constant 1.000000e+00 : f32
    %cst_24 = arith.constant 0.000000e+00 : f32
    %75 = vector.broadcast %cst_23 : f32 to vector<4x256xf32>
    %76 = vector.broadcast %cst_24 : f32 to vector<4x256xf32>
    %77 = arith.select %74, %75, %76 : vector<4x256xi1>, vector<4x256xf32>
    %c36 = arith.constant 36 : index
    %c0_25 = arith.constant 0 : index
    %78 = vector.load %arg5[%c36, %c0_25] : memref<40x256xf32, #tpu.memory_space<vmem>>, vector<4x256xf32>
    tpu.vector_store %arg5[%c36, %c0_25], %77 {strides = array<i32>} : memref<40x256xf32, #tpu.memory_space<vmem>>, vector<4x256xf32>,
    %79 = vector.extract_strided_slice %68 {offsets = [0, 0], sizes = [4, 256], strides = [1, 1]} : vector<4x290xf32> to vector<4x256xf32>
    %c1_i32 = arith.constant 1 : i32
    %80 = vector.broadcast %c1_i32 : i32 to vector<4x256xi32>
    %81 = arith.cmpi sge, %71, %80 : vector<4x256xi32>
    %cst_26 = arith.constant 0.000000e+00 : f32
    %82 = vector.broadcast %cst_26 : f32 to vector<4x256xf32>
    %83 = arith.select %81, %79, %82 : vector<4x256xi1>, vector<4x256xf32>
    %c0_27 = arith.constant 0 : index
    %c0_28 = arith.constant 0 : index
    %84 = vector.load %arg5[%c0_27, %c0_28] : memref<40x256xf32, #tpu.memory_space<vmem>>, vector<4x256xf32>
    tpu.vector_store %arg5[%c0_27, %c0_28], %83 {strides = array<i32>} : memref<40x256xf32, #tpu.memory_space<vmem>>, vector<4x256xf32>,
    %85 = vector.extract_strided_slice %68 {offsets = [0, 1], sizes = [4, 256], strides = [1, 1]} : vector<4x290xf32> to vector<4x256xf32>
    %c4 = arith.constant 4 : index
    %c0_29 = arith.constant 0 : index
    %86 = vector.load %arg5[%c4, %c0_29] : memref<40x256xf32, #tpu.memory_space<vmem>>, vector<4x256xf32>
    tpu.vector_store %arg5[%c4, %c0_29], %85 {strides = array<i32>} : memref<40x256xf32, #tpu.memory_space<vmem>>, vector<4x256xf32>,
    %87 = vector.extract_strided_slice %68 {offsets = [0, 2], sizes = [4, 256], strides = [1, 1]} : vector<4x290xf32> to vector<4x256xf32>
    %c15_i32_30 = arith.constant 15 : i32
    %88 = vector.broadcast %c15_i32_30 : i32 to vector<4x256xi32>
    %89 = arith.cmpi slt, %71, %88 : vector<4x256xi32>
    %cst_31 = arith.constant 0.000000e+00 : f32
    %90 = vector.broadcast %cst_31 : f32 to vector<4x256xf32>
    %91 = arith.select %89, %87, %90 : vector<4x256xi1>, vector<4x256xf32>
    %c8 = arith.constant 8 : index
    %c0_32 = arith.constant 0 : index
    %92 = vector.load %arg5[%c8, %c0_32] : memref<40x256xf32, #tpu.memory_space<vmem>>, vector<4x256xf32>
    tpu.vector_store %arg5[%c8, %c0_32], %91 {strides = array<i32>} : memref<40x256xf32, #tpu.memory_space<vmem>>, vector<4x256xf32>,
    %93 = vector.extract_strided_slice %68 {offsets = [0, 16], sizes = [4, 256], strides = [1, 1]} : vector<4x290xf32> to vector<4x256xf32>
    %c1_i32_33 = arith.constant 1 : i32
    %94 = vector.broadcast %c1_i32_33 : i32 to vector<4x256xi32>
    %95 = arith.cmpi sge, %71, %94 : vector<4x256xi32>
    %cst_34 = arith.constant 0.000000e+00 : f32
    %96 = vector.broadcast %cst_34 : f32 to vector<4x256xf32>
    %97 = arith.select %95, %93, %96 : vector<4x256xi1>, vector<4x256xf32>
    %c12 = arith.constant 12 : index
    %c0_35 = arith.constant 0 : index
    %98 = vector.load %arg5[%c12, %c0_35] : memref<40x256xf32, #tpu.memory_space<vmem>>, vector<4x256xf32>
    tpu.vector_store %arg5[%c12, %c0_35], %97 {strides = array<i32>} : memref<40x256xf32, #tpu.memory_space<vmem>>, vector<4x256xf32>,
    %99 = vector.extract_strided_slice %68 {offsets = [0, 17], sizes = [4, 256], strides = [1, 1]} : vector<4x290xf32> to vector<4x256xf32>
    %c16 = arith.constant 16 : index
    %c0_36 = arith.constant 0 : index
    %100 = vector.load %arg5[%c16, %c0_36] : memref<40x256xf32, #tpu.memory_space<vmem>>, vector<4x256xf32>
    tpu.vector_store %arg5[%c16, %c0_36], %99 {strides = array<i32>} : memref<40x256xf32, #tpu.memory_space<vmem>>, vector<4x256xf32>,
    %101 = vector.extract_strided_slice %68 {offsets = [0, 18], sizes = [4, 256], strides = [1, 1]} : vector<4x290xf32> to vector<4x256xf32>
    %c15_i32_37 = arith.constant 15 : i32
    %102 = vector.broadcast %c15_i32_37 : i32 to vector<4x256xi32>
    %103 = arith.cmpi slt, %71, %102 : vector<4x256xi32>
    %cst_38 = arith.constant 0.000000e+00 : f32
    %104 = vector.broadcast %cst_38 : f32 to vector<4x256xf32>
    %105 = arith.select %103, %101, %104 : vector<4x256xi1>, vector<4x256xf32>
    %c20 = arith.constant 20 : index
    %c0_39 = arith.constant 0 : index
    %106 = vector.load %arg5[%c20, %c0_39] : memref<40x256xf32, #tpu.memory_space<vmem>>, vector<4x256xf32>
    tpu.vector_store %arg5[%c20, %c0_39], %105 {strides = array<i32>} : memref<40x256xf32, #tpu.memory_space<vmem>>, vector<4x256xf32>,
    %107 = vector.extract_strided_slice %68 {offsets = [0, 32], sizes = [4, 256], strides = [1, 1]} : vector<4x290xf32> to vector<4x256xf32>
    %c1_i32_40 = arith.constant 1 : i32
    %108 = vector.broadcast %c1_i32_40 : i32 to vector<4x256xi32>
    %109 = arith.cmpi sge, %71, %108 : vector<4x256xi32>
    %cst_41 = arith.constant 0.000000e+00 : f32
    %110 = vector.broadcast %cst_41 : f32 to vector<4x256xf32>
    %111 = arith.select %109, %107, %110 : vector<4x256xi1>, vector<4x256xf32>
    %c24 = arith.constant 24 : index
    %c0_42 = arith.constant 0 : index
    %112 = vector.load %arg5[%c24, %c0_42] : memref<40x256xf32, #tpu.memory_space<vmem>>, vector<4x256xf32>
    tpu.vector_store %arg5[%c24, %c0_42], %111 {strides = array<i32>} : memref<40x256xf32, #tpu.memory_space<vmem>>, vector<4x256xf32>,
    %113 = vector.extract_strided_slice %68 {offsets = [0, 33], sizes = [4, 256], strides = [1, 1]} : vector<4x290xf32> to vector<4x256xf32>
    %c28 = arith.constant 28 : index
    %c0_43 = arith.constant 0 : index
    %114 = vector.load %arg5[%c28, %c0_43] : memref<40x256xf32, #tpu.memory_space<vmem>>, vector<4x256xf32>
    tpu.vector_store %arg5[%c28, %c0_43], %113 {strides = array<i32>} : memref<40x256xf32, #tpu.memory_space<vmem>>, vector<4x256xf32>,
    %115 = vector.extract_strided_slice %68 {offsets = [0, 34], sizes = [4, 256], strides = [1, 1]} : vector<4x290xf32> to vector<4x256xf32>
    %c15_i32_44 = arith.constant 15 : i32
    %116 = vector.broadcast %c15_i32_44 : i32 to vector<4x256xi32>
    %117 = arith.cmpi slt, %71, %116 : vector<4x256xi32>
    %cst_45 = arith.constant 0.000000e+00 : f32
    %118 = vector.broadcast %cst_45 : f32 to vector<4x256xf32>
    %119 = arith.select %117, %115, %118 : vector<4x256xi1>, vector<4x256xf32>
    %c32 = arith.constant 32 : index
    %c0_46 = arith.constant 0 : index
    %120 = vector.load %arg5[%c32, %c0_46] : memref<40x256xf32, #tpu.memory_space<vmem>>, vector<4x256xf32>
    tpu.vector_store %arg5[%c32, %c0_46], %119 {strides = array<i32>} : memref<40x256xf32, #tpu.memory_space<vmem>>, vector<4x256xf32>,
    %c0_47 = arith.constant 0 : index
    %c0_48 = arith.constant 0 : index
    %121 = vector.load %arg0[%c0_47, %c0_48] : memref<8x40xf32, #tpu.memory_space<vmem>>, vector<8x40xf32>
    %c0_49 = arith.constant 0 : index
    %c0_50 = arith.constant 0 : index
    %122 = vector.load %arg5[%c0_49, %c0_50] : memref<40x256xf32, #tpu.memory_space<vmem>>, vector<40x256xf32>
    %cst_51 = arith.constant dense<0.000000e+00> : vector<8x256xf32>
    %123 = tpu.matmul %121, %122, %cst_51 {dimension_numbers = #tpu.dot_dimension_numbers<[1], [0], [0], [1], [0, 0, 1, 1], [], []>} : vector<8x40xf32>, vector<40x256xf32>, vector<8x256xf32> -> vector<8x256xf32>
    %cst_52 = arith.constant 0.000000e+00 : f32
    %124 = vector.broadcast %cst_52 : f32 to vector<8x256xf32>
    %125 = arith.cmpf oge, %123, %124 : vector<8x256xf32>
    %cst_53 = arith.constant 0.00999999977 : f32
    %126 = vector.broadcast %cst_53 : f32 to vector<8x256xf32>
    %127 = arith.mulf %126, %123 : vector<8x256xf32>
    %128 = arith.select %125, %123, %127 : vector<8x256xi1>, vector<8x256xf32>
    %c0_54 = arith.constant 0 : index
    %c0_55 = arith.constant 0 : index
    %129 = vector.load %arg3[%c0_54, %c0_55] : memref<8x256xf32, #tpu.memory_space<vmem>>, vector<8x256xf32>
    tpu.vector_store %arg3[%c0_54, %c0_55], %128 {strides = array<i32>} : memref<8x256xf32, #tpu.memory_space<vmem>>, vector<8x256xf32>,
    return
  }
}

</mosaic_0001>

<llo_original>
// kernel: moving_bias_conv.1
$region0: #{moving_bias_conv.1}
  #allocation0 [shape = 'u32[]', space=smem, size = 0x4, offset = 0x4, fixed_abs, tag = 'smem constant byte address 0x4 - core index']
  #allocation1 [shape = 'u32[144,128]{1,0:T(1,128)}', space=vmem, size = 0x12000, scoped, tag = 'internal scratch']
  #allocation2 [shape = 'f32[4,290]{1,0:T(4,128)}', space=vmem, size = 0x1800, scoped, tag = 'scratch operand']
  #allocation3 [shape = 'f32[40,256]{1,0:T(8,128)}', space=vmem, size = 0xa000, scoped, tag = 'scratch operand']
  %s0 = inlined_call_operand.vmem [shape: f32[8,40], index: 0, kind: input, shape index: {}]
  %s1 = inlined_call_operand.vmem [shape: f32[4,256], index: 1, kind: input, shape index: {}]
  %s2 = inlined_call_operand.vmem [shape: f32[4,576], index: 2, kind: input, shape index: {}]
  %s3 = inlined_call_operand.vmem [shape: f32[8,256], index: 3, kind: output, shape index: {}]
  %s4 = sld [smem:[#allocation0]]
  $region22: #{moving_bias_conv.1} parent=0
    _
  %s6 = ssub.s32 1, %s4
  %s7 = scalar_select 0, %s6, %s4
  // Predicated region
  $region2: #{moving_bias_conv.1} parent=0 // pred_check
    _
  $region3: #{moving_bias_conv.1} parent=0 // pred_check_branch
    %9 = sbr.rel (0) target = $region5
  $region4: #{moving_bias_conv.1} parent=0 // pred_region
    _
  $region5: #{moving_bias_conv.1} parent=0 // pred_fallthru
    _
  // Predicated region
  $region6: #{moving_bias_conv.1} parent=0 // pred_check
    _
  $region7: #{moving_bias_conv.1} parent=0 // pred_check_branch
    %11 = sbr.rel (0) target = $region9
  $region8: #{moving_bias_conv.1} parent=0 // pred_region
    _
  $region9: #{moving_bias_conv.1} parent=0 // pred_fallthru
    _
  // Predicated region
  $region10: #{moving_bias_conv.1} parent=0 // pred_check
    _
  $region11: #{moving_bias_conv.1} parent=0 // pred_check_branch
    %13 = sbr.rel (0) target = $region13
  $region12: #{moving_bias_conv.1} parent=0 // pred_region
    _
  $region13: #{moving_bias_conv.1} parent=0 // pred_fallthru
    _
  %v14 = vld [vmem:[%s1] sm:$0xff]
  %v15 = vld [vmem:[%s2] sm:$0xff]
  %v16 = vld [vmem:[%s2 + $0x8] sm:$0xff]
  %17 = vst [vmem:[#allocation2] sm:$0xff] 0.0
  %vm18 = vcmask 273408
  %19 = vst.msk [vmem:[#allocation2 + $0x8] sm:$0xf] %vm18, 0.0
  %21 = vrot.lane.b32.xlu0 %v15, 28
  %v22 = vpop.permute.xlu0 %21
  %v24 = vsub.f32 %v14, %v22
  %26 = vrot.lane.b32.xlu0 %v24, 17
  %v27 = vpop.permute.xlu0 %26
  %vm29 = vcmask 265352
  %30 = vst.msk [vmem:[#allocation2] sm:$0xf] %vm29, %v27
  %31 = vrot.lane.b32.xlu0 %v15, 20
  %v32 = vpop.permute.xlu0 %31
  %v33 = vrot.slane %v32, 4
  %vm34 = vcmask 162816
  %v35 = vsel %vm34, %v32, %v33
  %v37 = vsub.f32 %v14, %v35
  %39 = vrot.lane.b32.xlu0 %v37, 17
  %v40 = vpop.permute.xlu0 %39
  %vm42 = vcmask 396552
  %43 = vst.msk [vmem:[#allocation2] sm:$0xf] %vm42, %v40
  %44 = vrot.lane.b32.xlu0 %v15, 12
  %v45 = vpop.permute.xlu0 %44
  %v46 = vrot.slane %v45, 4
  %vm47 = vcmask 97280
  %v48 = vsel %vm47, %v45, %v46
  %v50 = vsub.f32 %v14, %v48
  %52 = vrot.lane.b32.xlu0 %v50, 17
  %v53 = vpop.permute.xlu0 %52
  %vm55 = vcmask 527752
  %56 = vst.msk [vmem:[#allocation2] sm:$0xf] %vm55, %v53
  %57 = vrot.lane.b32.xlu0 %v15, 4
  %v58 = vpop.permute.xlu0 %57
  %v59 = vrot.slane %v58, 4
  %vm60 = vcmask 31744
  %v61 = vsel %vm60, %v58, %v59
  %v63 = vsub.f32 %v14, %v61
  %65 = vrot.lane.b32.xlu0 %v63, 17
  %v66 = vpop.permute.xlu0 %65
  %vm68 = vcmask 658952
  %69 = vst.msk [vmem:[#allocation2] sm:$0xf] %vm68, %v66
  %70 = vrot.lane.b32.xlu0 %v15, 124
  %v71 = vpop.permute.xlu0 %70
  %v72 = vrot.slane %v71, 4
  %v74 = vsub.f32 %v14, %v72
  %76 = vrot.lane.b32.xlu0 %v74, 17
  %v77 = vpop.permute.xlu0 %76
  %vm79 = vcmask 790152
  %80 = vst.msk [vmem:[#allocation2] sm:$0xf] %vm79, %v77
  %81 = vrot.lane.b32.xlu0 %v15, 116
  %v82 = vpop.permute.xlu0 %81
  %v83 = vrot.slane %v82, 4
  %v85 = vsub.f32 %v14, %v83
  %87 = vrot.lane.b32.xlu0 %v85, 17
  %v88 = vpop.permute.xlu0 %87
  %vm90 = vcmask 921352
  %91 = vst.msk [vmem:[#allocation2] sm:$0xf] %vm90, %v88
  %93 = vrot.lane.b32.xlu0 %v15, 108
  %v94 = vpop.permute.xlu0 %93
  %95 = vrot.lane.b32.xlu0 %v16, 108
  %v96 = vpop.permute.xlu0 %95
  %v97 = vrot.slane %v94, 4
  %vm98 = vcmask 883712
  %v99 = vsel %vm98, %v97, %v96
  %v101 = vsub.f32 %v14, %v99
  %103 = vrot.lane.b32.xlu0 %v101, 17
  %v104 = vpop.permute.xlu0 %103
  %v105 = vrot.slane %v104, 4
  %vm106 = vcmask 138240
  %v107 = vsel %vm106, %v105, %v104
  %vm109 = vcmask 1044360
  %vm110 = vcmask 7172
  %vm111 = vmor %vm110, %vm109
  %112 = vst.msk [vmem:[#allocation2] sm:$0xff] %vm111, %v107
  %113 = vrot.lane.b32.xlu0 %v16, 100
  %v114 = vpop.permute.xlu0 %113
  %v116 = vsub.f32 %v14, %v114
  %118 = vrot.lane.b32.xlu0 %v116, 17
  %v119 = vpop.permute.xlu0 %118
  %vm121 = vcmask 134152
  %122 = vst.msk [vmem:[#allocation2 + $0x4] sm:$0xf] %vm121, %v119
  %v124 = vrot.slane %v14, 4
  %126 = vrot.lane.b32.xlu0 %v16, 92
  %v127 = vpop.permute.xlu0 %126
  %v129 = vsub.f32 %v124, %v127
  %131 = vrot.lane.b32.xlu0 %v129, 17
  %v132 = vpop.permute.xlu0 %131
  %134 = vst.msk [vmem:[#allocation2 + $0x4] sm:$0xf] %vm29, %v132
  %135 = vrot.lane.b32.xlu0 %v14, 112
  %v136 = vpop.permute.xlu0 %135
  %v137 = vrot.slane %v136, 4
  %139 = vrot.lane.b32.xlu0 %v16, 68
  %v140 = vpop.permute.xlu0 %139
  %v142 = vsub.f32 %v137, %v140
  %144 = vrot.lane.b32.xlu0 %v142, 33
  %v145 = vpop.permute.xlu0 %144
  %147 = vst.msk [vmem:[#allocation2 + $0x4] sm:$0xf] %vm42, %v145
  %148 = vrot.lane.b32.xlu0 %v14, 96
  %v149 = vpop.permute.xlu0 %148
  %v150 = vrot.slane %v149, 4
  %152 = vrot.lane.b32.xlu0 %v16, 44
  %v153 = vpop.permute.xlu0 %152
  %v155 = vsub.f32 %v150, %v153
  %157 = vrot.lane.b32.xlu0 %v155, 49
  %v158 = vpop.permute.xlu0 %157
  %160 = vst.msk [vmem:[#allocation2 + $0x4] sm:$0xf] %vm55, %v158
  %161 = vrot.lane.b32.xlu0 %v14, 80
  %v162 = vpop.permute.xlu0 %161
  %v163 = vrot.slane %v162, 4
  %165 = vrot.lane.b32.xlu0 %v16, 20
  %v166 = vpop.permute.xlu0 %165
  %v168 = vsub.f32 %v163, %v166
  %170 = vrot.lane.b32.xlu0 %v168, 65
  %v171 = vpop.permute.xlu0 %170
  %173 = vst.msk [vmem:[#allocation2 + $0x4] sm:$0xf] %vm68, %v171
  %174 = vrot.lane.b32.xlu0 %v14, 64
  %v175 = vpop.permute.xlu0 %174
  %v176 = vrot.slane %v175, 4
  %178 = vrot.lane.b32.xlu0 %v16, 124
  %v179 = vpop.permute.xlu0 %178
  %v180 = vrot.slane %v179, 4
  %v182 = vsub.f32 %v176, %v180
  %184 = vrot.lane.b32.xlu0 %v182, 81
  %v185 = vpop.permute.xlu0 %184
  %187 = vst.msk [vmem:[#allocation2 + $0x4] sm:$0xf] %vm79, %v185
  %188 = vrot.lane.b32.xlu0 %v14, 48
  %v189 = vpop.permute.xlu0 %188
  %v190 = vrot.slane %v189, 4
  %v192 = vrot.slane %v114, 4
  %v194 = vsub.f32 %v190, %v192
  %196 = vrot.lane.b32.xlu0 %v194, 97
  %v197 = vpop.permute.xlu0 %196
  %199 = vst.msk [vmem:[#allocation2 + $0x4] sm:$0xf] %vm90, %v197
  %200 = vrot.lane.b32.xlu0 %v14, 32
  %v201 = vpop.permute.xlu0 %200
  %v202 = vrot.slane %v201, 4
  %204 = vrot.lane.b32.xlu0 %v16, 76
  %v205 = vpop.permute.xlu0 %204
  %v206 = vrot.slane %v205, 4
  %v208 = vsub.f32 %v202, %v206
  %210 = vrot.lane.b32.xlu0 %v208, 113
  %v211 = vpop.permute.xlu0 %210
  %v212 = vrot.slane %v211, 4
  %vm213 = vcmask 924672
  %v214 = vsel %vm213, %v212, %v211
  %216 = vst.msk [vmem:[#allocation2 + $0x4] sm:$0xff] %vm111, %v214
  %217 = vrot.lane.b32.xlu0 %v14, 16
  %v218 = vpop.permute.xlu0 %217
  %v219 = vrot.slane %v218, 4
  %221 = vrot.lane.b32.xlu0 %v16, 52
  %v222 = vpop.permute.xlu0 %221
  %v223 = vrot.slane %v222, 4
  %v225 = vsub.f32 %v219, %v223
  %227 = vrot.lane.b32.xlu0 %v225, 1
  %v228 = vpop.permute.xlu0 %227
  %230 = vst.msk [vmem:[#allocation2 + $0x8] sm:$0xf] %vm121, %v228
  %v231 = vld [vmem:[#allocation2] sm:$0xff]
  %v232 = vld [vmem:[#allocation2 + $0x8] sm:$0xf]
  %v233 = vlaneseq
  %v234 = vand.u32 %v233, 127
  %v235 = vadd.s32 %v234, 128
  %v236 = vand.u32 %v234, 15
  %v237 = vand.u32 %v235, 15
  %v238 = vlaneseq
  %v239 = vshrl.u32 %v238, 7
  %vm240 = vcmp.eq.s32.totalorder %v239, 0
  %v241 = vsel %vm240, 1.0, 0.0
  %v243 = vrot.slane %v241, 4
  %245 = vst [vmem:[#allocation3 + $0x40] sm:$0xf0] %v243
  %246 = vst [vmem:[#allocation3 + $0x48] sm:$0xf0] %v243
  %vm247 = vcmp.ge.s32.totalorder %v236, 1
  %vm248 = vcmp.ge.s32.totalorder %v237, 1
  %v250 = vcombine.high %v231, %v231
  %v252 = vsel %vm247, %v231, 0.0
  %v253 = vsel %vm248, %v250, 0.0
  %254 = vst [vmem:[#allocation3] sm:$0xf] %v252
  %255 = vst [vmem:[#allocation3 + $0x8] sm:$0xf] %v253
  %v257 = vcombine.low %v231, %v231
  %v258 = vcombine.low %v232, %v232
  %259 = vrot.lane.b32.xlu0 %v257, 127
  %v260 = vpop.permute.xlu0 %259
  %261 = vrot.lane.b32.xlu0 %v231, 127
  %v262 = vpop.permute.xlu0 %261
  %263 = vrot.lane.b32.xlu0 %v258, 127
  %v264 = vpop.permute.xlu0 %263
  %vm265 = vcmask 1039360
  %v266 = vsel %vm265, %v260, %v262
  %v267 = vsel %vm265, %v262, %v264
  %270 = vst [vmem:[#allocation3] sm:$0xf0] %v266
  %271 = vst [vmem:[#allocation3 + $0x8] sm:$0xf0] %v267
  %vm272 = vcmp.lt.s32.totalorder %v236, 15
  %vm273 = vcmp.lt.s32.totalorder %v237, 15
  %274 = vrot.lane.b32.xlu0 %v231, 126
  %v275 = vpop.permute.xlu0 %274
  %276 = vrot.lane.b32.xlu0 %v250, 126
  %v277 = vpop.permute.xlu0 %276
  %278 = vrot.lane.b32.xlu0 %v232, 126
  %v279 = vpop.permute.xlu0 %278
  %vm280 = vcmask 1031168
  %v281 = vsel %vm280, %v275, %v277
  %v282 = vsel %vm280, %v277, %v279
  %v285 = vsel %vm272, %v281, 0.0
  %v286 = vsel %vm273, %v282, 0.0
  %287 = vst [vmem:[#allocation3 + $0x10] sm:$0xf] %v285
  %288 = vst [vmem:[#allocation3 + $0x18] sm:$0xf] %v286
  %289 = vrot.lane.b32.xlu0 %v231, 112
  %v290 = vpop.permute.xlu0 %289
  %291 = vrot.lane.b32.xlu0 %v250, 112
  %v292 = vpop.permute.xlu0 %291
  %293 = vrot.lane.b32.xlu0 %v232, 112
  %v294 = vpop.permute.xlu0 %293
  %vm295 = vcmask 916480
  %v296 = vsel %vm295, %v290, %v292
  %v297 = vsel %vm295, %v292, %v294
  %v300 = vsel %vm247, %v296, 0.0
  %v301 = vsel %vm248, %v297, 0.0
  %v304 = vrot.slane %v300, 4
  %v305 = vrot.slane %v301, 4
  %308 = vst [vmem:[#allocation3 + $0x10] sm:$0xf0] %v304
  %309 = vst [vmem:[#allocation3 + $0x18] sm:$0xf0] %v305
  %310 = vrot.lane.b32.xlu0 %v231, 111
  %v311 = vpop.permute.xlu0 %310
  %312 = vrot.lane.b32.xlu0 %v250, 111
  %v313 = vpop.permute.xlu0 %312
  %314 = vrot.lane.b32.xlu0 %v232, 111
  %v315 = vpop.permute.xlu0 %314
  %vm316 = vcmask 908288
  %v317 = vsel %vm316, %v311, %v313
  %v318 = vsel %vm316, %v313, %v315
  %321 = vst [vmem:[#allocation3 + $0x20] sm:$0xf] %v317
  %322 = vst [vmem:[#allocation3 + $0x28] sm:$0xf] %v318
  %323 = vrot.lane.b32.xlu0 %v231, 110
  %v324 = vpop.permute.xlu0 %323
  %325 = vrot.lane.b32.xlu0 %v250, 110
  %v326 = vpop.permute.xlu0 %325
  %327 = vrot.lane.b32.xlu0 %v232, 110
  %v328 = vpop.permute.xlu0 %327
  %vm329 = vcmask 900096
  %v330 = vsel %vm329, %v324, %v326
  %v331 = vsel %vm329, %v326, %v328
  %v334 = vsel %vm272, %v330, 0.0
  %v335 = vsel %vm273, %v331, 0.0
  %v338 = vrot.slane %v334, 4
  %v339 = vrot.slane %v335, 4
  %342 = vst [vmem:[#allocation3 + $0x20] sm:$0xf0] %v338
  %343 = vst [vmem:[#allocation3 + $0x28] sm:$0xf0] %v339
  %344 = vrot.lane.b32.xlu0 %v231, 96
  %v345 = vpop.permute.xlu0 %344
  %346 = vrot.lane.b32.xlu0 %v250, 96
  %v347 = vpop.permute.xlu0 %346
  %348 = vrot.lane.b32.xlu0 %v232, 96
  %v349 = vpop.permute.xlu0 %348
  %vm350 = vcmask 785408
  %v351 = vsel %vm350, %v345, %v347
  %v352 = vsel %vm350, %v347, %v349
  %v355 = vsel %vm247, %v351, 0.0
  %v356 = vsel %vm248, %v352, 0.0
  %357 = vst [vmem:[#allocation3 + $0x30] sm:$0xf] %v355
  %358 = vst [vmem:[#allocation3 + $0x38] sm:$0xf] %v356
  %359 = vrot.lane.b32.xlu0 %v257, 95
  %v360 = vpop.permute.xlu0 %359
  %361 = vrot.lane.b32.xlu0 %v231, 95
  %v362 = vpop.permute.xlu0 %361
  %363 = vrot.lane.b32.xlu0 %v258, 95
  %v364 = vpop.permute.xlu0 %363
  %vm365 = vcmask 777216
  %v366 = vsel %vm365, %v360, %v362
  %v367 = vsel %vm365, %v362, %v364
  %370 = vst [vmem:[#allocation3 + $0x30] sm:$0xf0] %v366
  %371 = vst [vmem:[#allocation3 + $0x38] sm:$0xf0] %v367
  %372 = vrot.lane.b32.xlu0 %v231, 94
  %v373 = vpop.permute.xlu0 %372
  %374 = vrot.lane.b32.xlu0 %v250, 94
  %v375 = vpop.permute.xlu0 %374
  %376 = vrot.lane.b32.xlu0 %v232, 94
  %v377 = vpop.permute.xlu0 %376
  %vm378 = vcmask 769024
  %v379 = vsel %vm378, %v373, %v375
  %v380 = vsel %vm378, %v375, %v377
  %v383 = vsel %vm272, %v379, 0.0
  %v384 = vsel %vm273, %v380, 0.0
  %385 = vst [vmem:[#allocation3 + $0x40] sm:$0xf] %v383
  %386 = vst [vmem:[#allocation3 + $0x48] sm:$0xf] %v384
  %v387 = vld [vmem:[%s0] sm:$0xff]
  %v388 = vld [vmem:[#allocation3] sm:$0xff]
  %v389 = vld [vmem:[#allocation3 + $0x8] sm:$0xff]
  %v390 = vld [vmem:[#allocation3 + $0x10] sm:$0xff]
  %v391 = vld [vmem:[#allocation3 + $0x18] sm:$0xff]
  %v392 = vld [vmem:[#allocation3 + $0x20] sm:$0xff]
  %v393 = vld [vmem:[#allocation3 + $0x28] sm:$0xff]
  %v394 = vld [vmem:[#allocation3 + $0x30] sm:$0xff]
  %v395 = vld [vmem:[#allocation3 + $0x38] sm:$0xff]
  %v396 = vld [vmem:[#allocation3 + $0x40] sm:$0xff]
  %v397 = vld [vmem:[#allocation3 + $0x48] sm:$0xff]
  %vm398 = vcmask 326656
  %v400 = vsel %vm398, %v387, 0
  %402 = vmatprep.subr.mxu0 0.0
  %403 = vmatpush1.msra.mxu0 0.0
  %404 = vmatprep.subr.mxu0 0.0
  %405 = vmatpush1.msra.mxu0 0.0
  %406 = vmatprep.subr.mxu0 0.0
  %407 = vmatpush1.msra.mxu0 0.0
  %408 = vmatprep.subr.mxu0 0.0
  %409 = vmatpush1.msra.mxu0 0.0
  %410 = vmatprep.subr.mxu0 0.0
  %411 = vmatpush1.msra.mxu0 0.0
  %412 = vmatprep.subr.mxu0 0.0
  %413 = vmatpush1.msra.mxu0 0.0
  %414 = vmatprep.subr.mxu0 0.0
  %415 = vmatpush1.msra.mxu0 0.0
  %416 = vmatprep.subr.mxu0 0.0
  %417 = vmatpush1.msra.mxu0 0.0
  %418 = vmatprep.subr.mxu0 0.0
  %419 = vmatpush1.msra.mxu0 0.0
  %420 = vmatprep.subr.mxu0 0.0
  %421 = vmatpush1.msra.mxu0 0.0
  %422 = vmatprep.subr.mxu0 0.0
  %423 = vmatpush1.msra.mxu0 0.0
  %424 = vmatprep.subr.mxu0 %v397
  %425 = vmatpush1.msra.mxu0 %v396
  %426 = vmatprep.subr.mxu0 %v395
  %427 = vmatpush1.msra.mxu0 %v394
  %428 = vmatprep.subr.mxu0 %v393
  %429 = vmatpush1.msra.mxu0 %v392
  %430 = vmatprep.subr.mxu0 %v391
  %431 = vmatpush1.msra.mxu0 %v390
  %432 = vmatprep.subr.mxu0 %v389
  %433 = vmatpush1.msra.mxu0 %v388
  %434 = vmatprep.subr.mxu0 0.0
  %435 = vmatpush2.msra.mxu0 0.0
  %436 = vmatprep.subr.mxu0 0.0
  %437 = vmatpush2.msra.mxu0 0.0
  %438 = vmatprep.subr.mxu0 0.0
  %439 = vmatpush2.msra.mxu0 0.0
  %440 = vmatprep.subr.mxu0 0.0
  %441 = vmatpush2.msra.mxu0 0.0
  %442 = vmatprep.subr.mxu0 0.0
  %443 = vmatpush2.msra.mxu0 0.0
  %444 = vmatprep.subr.mxu0 0.0
  %445 = vmatpush2.msra.mxu0 0.0
  %446 = vmatprep.subr.mxu0 0.0
  %447 = vmatpush2.msra.mxu0 0.0
  %448 = vmatprep.subr.mxu0 0.0
  %449 = vmatpush2.msra.mxu0 0.0
  %450 = vmatprep.subr.mxu0 0.0
  %451 = vmatpush2.msra.mxu0 0.0
  %452 = vmatprep.subr.mxu0 0.0
  %453 = vmatpush2.msra.mxu0 0.0
  %454 = vmatprep.subr.mxu0 0.0
  %455 = vmatpush2.msra.mxu0 0.0
  %456 = vmatprep.subr.mxu0 0.0
  %457 = vmatpush2.msra.mxu0 0.0
  %458 = vmatprep.subr.mxu0 0.0
  %459 = vmatpush2.msra.mxu0 0.0
  %460 = vmatprep.subr.mxu0 0.0
  %461 = vmatpush2.msra.mxu0 0.0
  %462 = vmatprep.subr.mxu0 0.0
  %463 = vmatpush2.msra.mxu0 0.0
  %464 = vmatprep.subr.mxu0 0.0
  %465 = vmatpush2.msra.mxu0 0.0
  %466 = vmatprep.mubr.f32.mxu0 0.0
  %467 = vmatmul.mubr.f32.gmra.mxu0 %v400
  %v468 = vpop.f32.mrf.mxu0
  %v469 = vadd.f32 0.0, %v468
  %v470 = vpop.f32.mrf.mxu0
  %v471 = vadd.f32 0.0, %v470
  %472 = vdwg.mxu0
  %vm473 = vcmp.ge.f32.partialorder %v469, 0.0
  %vm474 = vcmp.ge.f32.partialorder %v471, 0.0
  %v475 = vmul.f32 %v469, 0.01
  %v476 = vmul.f32 %v471, 0.01
  %v477 = vsel %vm473, %v469, %v475
  %v478 = vsel %vm474, %v471, %v476
  %479 = vst [vmem:[%s3] sm:$0xff] %v477
  %480 = vst [vmem:[%s3 + $0x8] sm:$0xff] %v478
  // Predicated region
  $region14: #{moving_bias_conv.1} parent=0 // pred_check
    _
  $region15: #{moving_bias_conv.1} parent=0 // pred_check_branch
    %482 = sbr.rel (0) target = $region17
  $region16: #{moving_bias_conv.1} parent=0 // pred_region
    _
  $region17: #{moving_bias_conv.1} parent=0 // pred_fallthru
    _
  // Predicated region
  $region18: #{moving_bias_conv.1} parent=0 // pred_check
    _
  $region19: #{moving_bias_conv.1} parent=0 // pred_check_branch
    %484 = sbr.rel (0) target = $region21
  $region20: #{moving_bias_conv.1} parent=0 // pred_region
    _
  $region21: #{moving_bias_conv.1} parent=0 // pred_fallthru
    _

</llo_original>
